<compile_context>
chip_gen: v6e
topology: v6e:2x2x1
jax: 0.10.0
libtpu: 0.0.40
codegen_flags: <defaults>
</compile_context>

<pallas_src>
import functools

import numpy as np
import jax
import jax.numpy as jnp
from jax import lax
from jax.experimental import pallas as pl
from jax.experimental.pallas import tpu as pltpu

KPAD_DOWN = 128                 # down-conv contraction dim zero-padded to a full 128 lanes
DEFAULT_TILE_M = 512            # rows per grid step (raise to 1024-2048 on v6e for big inputs)
VMEM_LIMIT = 32 * 1024 * 1024   # well under v7x's 64 MiB per-TC VMEM; actual working set << 1 MiB


def _round_up(x, m):
    return (x + m - 1) // m * m


def _tiling(m):
    """Row tile (multiple of 8, <= DEFAULT_TILE_M) and padded row count."""
    tile = min(DEFAULT_TILE_M, _round_up(m, 8))
    return tile, _round_up(m, tile)


def _compiler_params():
    return pltpu.CompilerParams(dimension_semantics=("parallel",),
                                vmem_limit_bytes=VMEM_LIMIT)


# ----------------------------- Pallas kernels ------------------------------

def _down_kernel(p_ref, w_ref, b_ref, y_ref):
    # bf16 MXU matmul (f32 accumulate) + bias; the up-path ReLU is fused here so it is
    # applied once per element. Output is written narrow (C columns, not 128-padded).
    acc = jnp.dot(p_ref[...], w_ref[...], preferred_element_type=jnp.float32)
    y_ref[...] = jnp.maximum(acc + b_ref[...], 0.0).astype(y_ref.dtype)


def _up_stats_kernel(p_ref, w_ref, b_ref, m_ref, s_ref):
    # Pass 1 of the up path: sub-pixel ConvT matmul (bf16 MXU, f32 acc, packed 4*Cout
    # columns) + bias, then BatchNorm partial stats via two small MXU matmuls with the
    # (8, tile) validity mask as LHS (rows 0..3 = sub-pixel groups, rows 4..7 = zero).
    # Per-tile partials -> no cross-iteration dependency -> "parallel" grid axis.
    z = jnp.dot(p_ref[...], w_ref[...], preferred_element_type=jnp.float32) + b_ref[...]
    m = m_ref[...]                                               # (8, tile) f32 0/1 mask
    s_ref[0, 0, :, :] = jnp.dot(m, z, preferred_element_type=jnp.float32)
    s_ref[0, 1, :, :] = jnp.dot(m, z * z, preferred_element_type=jnp.float32)


def _up_apply_kernel(p_ref, w_ref, scale_ref, shift_ref, o_ref):
    # Pass 2: recompute the (nearly free) matmul and fuse BatchNorm scale/shift; the
    # ConvT bias is folded into shift in the glue. Narrow (4*Cout) lane output: only
    # the channels that survive the slice are ever written to HBM.
    z = jnp.dot(p_ref[...], w_ref[...], preferred_element_type=jnp.float32)
    o_ref[...] = (z * scale_ref[...] + shift_ref[...]).astype(o_ref.dtype)


# ---------------------------- pallas_call wrappers ---------------------------

def _down_call(p1, w, brow, tile_m):
    mp, k = p1.shape
    c = w.shape[1]
    return pl.pallas_call(
        _down_kernel,
        out_shape=jax.ShapeDtypeStruct((mp, c), jnp.bfloat16),
        grid=(mp // tile_m,),
        in_specs=[pl.BlockSpec((tile_m, k), lambda i: (i, 0)),
                  pl.BlockSpec((k, c), lambda i: (0, 0)),        # resident weight
                  pl.BlockSpec((1, c), lambda i: (0, 0))],       # resident bias
        out_specs=pl.BlockSpec((tile_m, c), lambda i: (i, 0)),
        compiler_params=_compiler_params(),
    )(p1, w, brow)


def _up_stats_call(p2, w, brow, vmask_t, tile_m):
    mp, k = p2.shape
    n = w.shape[1]                                               # 4 * Cout (packed, narrow)
    t = mp // tile_m
    return pl.pallas_call(
        _up_stats_kernel,
        out_shape=jax.ShapeDtypeStruct((t, 2, 8, n), jnp.float32),
        grid=(t,),
        in_specs=[pl.BlockSpec((tile_m, k), lambda i: (i, 0)),
                  pl.BlockSpec((k, n), lambda i: (0, 0)),        # resident weight
                  pl.BlockSpec((1, n), lambda i: (0, 0)),        # resident bias
                  pl.BlockSpec((8, tile_m), lambda i: (0, i))],  # transposed validity mask
        out_specs=pl.BlockSpec((1, 2, 8, n), lambda i: (i, 0, 0, 0)),  # per-tile partials
        compiler_params=_compiler_params(),
    )(p2, w, brow, vmask_t)


def _up_apply_call(p2, w, scale_row, shift_row, tile_m):
    mp, k = p2.shape
    n = w.shape[1]
    return pl.pallas_call(
        _up_apply_kernel,
        out_shape=jax.ShapeDtypeStruct((mp, n), jnp.float32),
        grid=(mp // tile_m,),
        in_specs=[pl.BlockSpec((tile_m, k), lambda i: (i, 0)),
                  pl.BlockSpec((k, n), lambda i: (0, 0)),
                  pl.BlockSpec((1, n), lambda i: (0, 0)),
                  pl.BlockSpec((1, n), lambda i: (0, 0))],
        out_specs=pl.BlockSpec((tile_m, n), lambda i: (i, 0)),
        compiler_params=_compiler_params(),
    )(p2, w, scale_row, shift_row)


# ------------------------------- JAX glue ----------------------------------

def _im2col(x_pad, K, stride, dilation, Hout, Wout):
    """x_pad: (N, Hp, Wp, C) -> (N*Hout*Wout, K*K*C); column order (kh, kw, cin)."""
    cols = []
    for i in range(K):
        for j in range(K):
            sl = x_pad[:, i * dilation: i * dilation + stride * Hout: stride,
                          j * dilation: j * dilation + stride * Wout: stride, :]
            cols.append(sl)
    p = jnp.concatenate(cols, axis=-1)
    return p.reshape(x_pad.shape[0] * Hout * Wout, K * K * x_pad.shape[-1])


def init_params(key, input_nc, inner_nc, outer_nc):
    # innermost block requires inner_nc == input_nc for the PyTorch module to be shape-consistent
    assert inner_nc == input_nc
    assert 16 * input_nc <= KPAD_DOWN
    k1, k2, k3, k4, k5, k6 = jax.random.split(key, 6)
    C = input_nc
    W1 = jax.random.normal(k1, (C, C, 4, 4), jnp.float32) * 0.1          # Conv2d OIHW
    b1 = jax.random.normal(k2, (C,), jnp.float32) * 0.1
    W2 = jax.random.normal(k3, (C, outer_nc, 4, 4), jnp.float32) * 0.1   # ConvT IOHW
    b2 = jax.random.normal(k4, (outer_nc,), jnp.float32) * 0.1
    gamma = 1.0 + 0.1 * jax.random.normal(k5, (outer_nc,), jnp.float32)
    beta = 0.1 * jax.random.normal(k6, (outer_nc,), jnp.float32)

    # down conv -> matmul weight: rows (kh,kw,ci) zero-padded to 128, narrow cols (co), bf16
    Wm1 = jnp.transpose(W1, (2, 3, 1, 0)).reshape(16 * C, C)
    Wm1 = jnp.pad(Wm1, ((0, KPAD_DOWN - 16 * C), (0, 0))).astype(jnp.bfloat16)
    b1row = b1[None, :].astype(jnp.float32)

    # ConvT(k=4,s=2,p=1) as a sub-pixel 2x2 conv, packed narrow:
    #   out[2m+1+s_h, 2n+1+s_w, co] = sum_{dh,dw,ci} y1_pad[m+1+dh, n+1+dw, ci]
    #                                                * W2[ci, co, 2+s_h-2*dh, 2+s_w-2*dw]
    # columns = group-major (s_h, s_w) blocks of outer_nc channels each (4*Cout total).
    rows = []
    for dh in range(2):
        for dw in range(2):
            cols = []
            for s_h in range(2):
                for s_w in range(2):
                    cols.append(W2[:, :, 2 + s_h - 2 * dh, 2 + s_w - 2 * dw])   # (C, Cout)
            rows.append(jnp.concatenate(cols, axis=1))                          # (C, 4*Cout)
    Wup = jnp.concatenate(rows, axis=0).astype(jnp.bfloat16)                    # (4C, 4*Cout)
    b2row = jnp.tile(b2, 4)[None, :].astype(jnp.float32)                        # (1, 4*Cout)

    return dict(W1=W1, b1=b1, W2=W2, b2=b2, gamma=gamma, beta=beta,
                Wm1=Wm1, b1row=b1row, Wup=Wup, b2row=b2row)


def unet_innermost_forward(x_nchw, params):
    N, C, H, W = x_nchw.shape
    Cout = params["gamma"].shape[0]
    x = jnp.transpose(x_nchw, (0, 2, 3, 1))                        # NHWC

    # ---- down: LeakyReLU(0.2) -> Conv2d(C->C, k=4, s=2, p=3, dilation=2) ----
    Hd = (H + 2 * 3 - 2 * (4 - 1) - 1) // 2 + 1
    Wd = (W + 2 * 3 - 2 * (4 - 1) - 1) // 2 + 1
    xa = jnp.where(x >= 0, x, 0.2 * x)                             # activation applied ONCE (act(0)=0)
    xp = jnp.pad(xa, ((0, 0), (3, 3), (3, 3), (0, 0)))
    p1 = _im2col(xp, 4, 2, 2, Hd, Wd).astype(jnp.bfloat16)         # (M1, 16C)
    M1 = N * Hd * Wd
    t1, M1p = _tiling(M1)
    p1 = jnp.pad(p1, ((0, M1p - M1), (0, KPAD_DOWN - 16 * C)))     # K zero-padded to 128 lanes
    y1 = _down_call(p1, params["Wm1"], params["b1row"], t1)        # (M1p, C) bf16, up ReLU fused
    y1 = y1[:M1].reshape(N, Hd, Wd, C)

    # ---- up: ConvTranspose2d(k=4,s=2,p=1) via sub-pixel conv (no zero-insertion) ----
    y1p = jnp.pad(y1, ((0, 0), (1, 1), (1, 1), (0, 0)))
    Hg, Wg = Hd + 1, Wd + 1
    p2 = _im2col(y1p, 2, 1, 1, Hg, Wg)                             # (M2, 4C) bf16
    M2 = N * Hg * Wg
    t2, M2p = _tiling(M2)
    p2 = jnp.pad(p2, ((0, M2p - M2), (0, 0)))

    # validity mask (transposed, row = sub-pixel group, col = flattened window index):
    # marks which (window, group) pairs land inside the cropped output; padded cols = 0.
    gh = jnp.arange(Hg)
    gw = jnp.arange(Wg)
    vh = jnp.stack([gh >= 1, gh <= Hd - 1], axis=0).astype(jnp.float32)     # (2, Hg) -> s_h
    vw = jnp.stack([gw >= 1, gw <= Wd - 1], axis=0).astype(jnp.float32)     # (2, Wg) -> s_w
    vm = (vh[:, None, :, None] * vw[None, :, None, :]).reshape(4, Hg * Wg)  # group = 2*s_h + s_w
    vm = jnp.tile(vm, (1, N))                                               # (4, M2)
    vmask_t = jnp.pad(vm, ((0, 4), (0, M2p - M2)))                          # (8, M2p)

    # ---- pass 1: matmul + masked per-channel sum / sum-sq via MXU (per-tile partials) ----
    stats = _up_stats_call(p2, params["Wup"], params["b2row"], vmask_t, t2)   # (T, 2, 8, 4*Cout)

    # ---- BatchNorm finalize (global batch statistics, training mode) in tiny glue ----
    st = jnp.sum(stats, axis=0)                                    # (2, 8, 4*Cout)
    ssum = sum(st[0, g, g * Cout:(g + 1) * Cout] for g in range(4))
    ssq = sum(st[1, g, g * Cout:(g + 1) * Cout] for g in range(4))
    count = jnp.float32(N * 2 * Hd * 2 * Wd)
    mean = ssum / count
    # NOTE: E[x^2]-E[x]^2 is cancellation-prone; acceptable at the current tolerance.
    var = jnp.maximum(ssq / count - mean * mean, 0.0)
    inv = lax.rsqrt(var + 1e-5)
    scale = params["gamma"] * inv
    shift = params["beta"] - mean * scale
    scale4 = jnp.tile(scale, 4)
    shift4 = jnp.tile(shift, 4) + params["b2row"][0] * scale4      # fold ConvT bias into shift
    scale_row = scale4[None, :]
    shift_row = shift4[None, :]

    # ---- pass 2: recompute matmul (MXU idle anyway) + fused BN apply, narrow output ----
    y2 = _up_apply_call(p2, params["Wup"], scale_row, shift_row, t2)   # (M2p, 4*Cout) f32

    # ---- pixel shuffle, crop, skip concat (now over a 4*Cout-wide tensor, not 512) ----
    y2 = y2[:M2].reshape(N, Hg, Wg, 2, 2, Cout)
    y2 = y2.transpose(0, 1, 3, 2, 4, 5).reshape(N, 2 * Hg, 2 * Wg, Cout)
    y2 = y2[:, 1:2 * Hd + 1, 1:2 * Wd + 1, :]
    y2 = jnp.transpose(y2, (0, 3, 1, 2))                           # NCHW

    return jnp.concatenate([y2, x_nchw], axis=1)


# --------------------------- pure-JAX reference ----------------------------

def ref_forward(x, params):
    y = jnp.where(x >= 0, x, 0.2 * x)
    y = lax.conv_general_dilated(
        y, params["W1"], window_strides=(2, 2), padding=((3, 3), (3, 3)),
        rhs_dilation=(2, 2), dimension_numbers=("NCHW", "OIHW", "NCHW"))
    y = y + params["b1"][None, :, None, None]
    y = jnp.maximum(y, 0.0)
    W2e = jnp.transpose(jnp.flip(params["W2"], axis=(2, 3)), (1, 0, 2, 3))   # -> OIHW
    y = lax.conv_general_dilated(
        y, W2e, window_strides=(1, 1), padding=((2, 2), (2, 2)),
        lhs_dilation=(2, 2), dimension_numbers=("NCHW", "OIHW", "NCHW"))
    y = y + params["b2"][None, :, None, None]
    mean = jnp.mean(y, axis=(0, 2, 3), keepdims=True)
    var = jnp.mean((y - mean) ** 2, axis=(0, 2, 3), keepdims=True)
    y = (params["gamma"][None, :, None, None] * (y - mean) / jnp.sqrt(var + 1e-5)
         + params["beta"][None, :, None, None])
    return jnp.concatenate([y, x], axis=1)


# --------------------------------- main -------------------------------------

if __name__ == "__main__":
    N, C, H, W = 2, 4, 16, 16          # input_nc = inner_nc = 4, outer_nc = 4
    x = jax.random.normal(jax.random.PRNGKey(0), (N, C, H, W), dtype=jnp.float32)
    params = init_params(jax.random.PRNGKey(42), input_nc=C, inner_nc=C, outer_nc=4)

    fwd = jax.jit(unet_innermost_forward)
    out = jax.block_until_ready(fwd(x, params))
    assert out.shape == (N, 4 + C, H, W), out.shape

    ref = jax.block_until_ready(ref_forward(x, params))
    # bf16 MXU inputs (f32 accumulation) vs. the f32 reference -> a few-percent tolerance.
    np.testing.assert_allclose(np.asarray(out), np.asarray(ref), rtol=7e-2, atol=7e-2)

    print("KERNEL_OK")
</pallas_src>

<mosaic_0001>
module attributes {stable_mosaic.version = 11 : i64} {
  func.func @_down_kernel(%arg0: i32, %arg1: memref<128x128xbf16, #tpu.memory_space<vmem>>, %arg2: memref<128x4xbf16, #tpu.memory_space<vmem>>, %arg3: memref<1x4xf32, #tpu.memory_space<vmem>>, %arg4: memref<128x4xbf16, #tpu.memory_space<vmem>>) attributes {dimension_semantics = [#tpu.dimension_semantics<parallel>], iteration_bounds = array<i64: 1>, scalar_prefetch = 0 : i64, scratch_operands = 0 : i64, tpu.core_type = #tpu.core_type<tc>, window_params = [{transform_indices = @transform_0, window_bounds = array<i64: 128, 128>}, {pipeline_mode = #tpu.pipeline_mode<synchronous>, transform_indices = @transform_1, window_bounds = array<i64: 128, 4>}, {pipeline_mode = #tpu.pipeline_mode<synchronous>, transform_indices = @transform_2, window_bounds = array<i64: 1, 4>}, {transform_indices = @transform_3, window_bounds = array<i64: 128, 4>}]} {
    %c0 = arith.constant 0 : index
    %c0_0 = arith.constant 0 : index
    %0 = vector.load %arg1[%c0, %c0_0] : memref<128x128xbf16, #tpu.memory_space<vmem>>, vector<128x128xbf16>
    %c0_1 = arith.constant 0 : index
    %c0_2 = arith.constant 0 : index
    %1 = vector.load %arg2[%c0_1, %c0_2] : memref<128x4xbf16, #tpu.memory_space<vmem>>, vector<128x4xbf16>
    %cst = arith.constant dense<0.000000e+00> : vector<128x4xf32>
    %2 = tpu.matmul %0, %1, %cst {dimension_numbers = #tpu.dot_dimension_numbers<[1], [0], [0], [1], [0, 0, 1, 1], [], []>} : vector<128x128xbf16>, vector<128x4xbf16>, vector<128x4xf32> -> vector<128x4xf32>
    %c0_3 = arith.constant 0 : index
    %c0_4 = arith.constant 0 : index
    %3 = vector.load %arg3[%c0_3, %c0_4] : memref<1x4xf32, #tpu.memory_space<vmem>>, vector<1x4xf32>
    %4 = vector.broadcast %3 : vector<1x4xf32> to vector<128x4xf32>
    %5 = arith.addf %2, %4 : vector<128x4xf32>
    %cst_5 = arith.constant 0.000000e+00 : f32
    %6 = vector.broadcast %cst_5 : f32 to vector<128x4xf32>
    %7 = arith.maximumf %5, %6 : vector<128x4xf32>
    %8 = arith.truncf %7 : vector<128x4xf32> to vector<128x4xbf16>
    %c0_6 = arith.constant 0 : index
    %c0_7 = arith.constant 0 : index
    %9 = vector.load %arg4[%c0_6, %c0_7] : memref<128x4xbf16, #tpu.memory_space<vmem>>, vector<128x4xbf16>
    tpu.vector_store %arg4[%c0_6, %c0_7], %8 {strides = array<i32>} : memref<128x4xbf16, #tpu.memory_space<vmem>>, vector<128x4xbf16>,
    return
  }
  func.func @transform_0(%arg0: i32) -> (i32, i32) {
    %c0_i32 = arith.constant 0 : i32
    %c0_i32_0 = arith.constant 0 : i32
    return %arg0, %c0_i32 : i32, i32
  }
  func.func @transform_1(%arg0: i32) -> (i32, i32) {
    %c0_i32 = arith.constant 0 : i32
    %c0_i32_0 = arith.constant 0 : i32
    %c0_i32_1 = arith.constant 0 : i32
    return %c0_i32, %c0_i32_0 : i32, i32
  }
  func.func @transform_2(%arg0: i32) -> (i32, i32) {
    %c0_i32 = arith.constant 0 : i32
    %c0_i32_0 = arith.constant 0 : i32
    %c0_i32_1 = arith.constant 0 : i32
    return %c0_i32, %c0_i32_0 : i32, i32
  }
  func.func @transform_3(%arg0: i32) -> (i32, i32) {
    %c0_i32 = arith.constant 0 : i32
    %c0_i32_0 = arith.constant 0 : i32
    return %arg0, %c0_i32 : i32, i32
  }
}

module attributes {stable_mosaic.version = 11 : i64} {
  func.func @_up_apply_kernel(%arg0: i32, %arg1: memref<168x16xbf16, #tpu.memory_space<vmem>>, %arg2: memref<16x16xbf16, #tpu.memory_space<vmem>>, %arg3: memref<1x16xf32, #tpu.memory_space<vmem>>, %arg4: memref<1x16xf32, #tpu.memory_space<vmem>>, %arg5: memref<168x16xf32, #tpu.memory_space<vmem>>) attributes {dimension_semantics = [#tpu.dimension_semantics<parallel>], iteration_bounds = array<i64: 1>, scalar_prefetch = 0 : i64, scratch_operands = 0 : i64, tpu.core_type = #tpu.core_type<tc>, window_params = [{transform_indices = @transform_0, window_bounds = array<i64: 168, 16>}, {pipeline_mode = #tpu.pipeline_mode<synchronous>, transform_indices = @transform_1, window_bounds = array<i64: 16, 16>}, {pipeline_mode = #tpu.pipeline_mode<synchronous>, transform_indices = @transform_2, window_bounds = array<i64: 1, 16>}, {pipeline_mode = #tpu.pipeline_mode<synchronous>, transform_indices = @transform_3, window_bounds = array<i64: 1, 16>}, {transform_indices = @transform_4, window_bounds = array<i64: 168, 16>}]} {
    %c0 = arith.constant 0 : index
    %c0_0 = arith.constant 0 : index
    %0 = vector.load %arg1[%c0, %c0_0] : memref<168x16xbf16, #tpu.memory_space<vmem>>, vector<168x16xbf16>
    %c0_1 = arith.constant 0 : index
    %c0_2 = arith.constant 0 : index
    %1 = vector.load %arg2[%c0_1, %c0_2] : memref<16x16xbf16, #tpu.memory_space<vmem>>, vector<16x16xbf16>
    %cst = arith.constant dense<0.000000e+00> : vector<168x16xf32>
    %2 = tpu.matmul %0, %1, %cst {dimension_numbers = #tpu.dot_dimension_numbers<[1], [0], [0], [1], [0, 0, 1, 1], [], []>} : vector<168x16xbf16>, vector<16x16xbf16>, vector<168x16xf32> -> vector<168x16xf32>
    %c0_3 = arith.constant 0 : index
    %c0_4 = arith.constant 0 : index
    %3 = vector.load %arg3[%c0_3, %c0_4] : memref<1x16xf32, #tpu.memory_space<vmem>>, vector<1x16xf32>
    %4 = vector.broadcast %3 : vector<1x16xf32> to vector<168x16xf32>
    %5 = arith.mulf %2, %4 : vector<168x16xf32>
    %c0_5 = arith.constant 0 : index
    %c0_6 = arith.constant 0 : index
    %6 = vector.load %arg4[%c0_5, %c0_6] : memref<1x16xf32, #tpu.memory_space<vmem>>, vector<1x16xf32>
    %7 = vector.broadcast %6 : vector<1x16xf32> to vector<168x16xf32>
    %8 = arith.addf %5, %7 : vector<168x16xf32>
    %c0_7 = arith.constant 0 : index
    %c0_8 = arith.constant 0 : index
    %9 = vector.load %arg5[%c0_7, %c0_8] : memref<168x16xf32, #tpu.memory_space<vmem>>, vector<168x16xf32>
    tpu.vector_store %arg5[%c0_7, %c0_8], %8 {strides = array<i32>} : memref<168x16xf32, #tpu.memory_space<vmem>>, vector<168x16xf32>,
    return
  }
  func.func @transform_0(%arg0: i32) -> (i32, i32) {
    %c0_i32 = arith.constant 0 : i32
    %c0_i32_0 = arith.constant 0 : i32
    return %arg0, %c0_i32 : i32, i32
  }
  func.func @transform_1(%arg0: i32) -> (i32, i32) {
    %c0_i32 = arith.constant 0 : i32
    %c0_i32_0 = arith.constant 0 : i32
    %c0_i32_1 = arith.constant 0 : i32
    return %c0_i32, %c0_i32_0 : i32, i32
  }
  func.func @transform_2(%arg0: i32) -> (i32, i32) {
    %c0_i32 = arith.constant 0 : i32
    %c0_i32_0 = arith.constant 0 : i32
    %c0_i32_1 = arith.constant 0 : i32
    return %c0_i32, %c0_i32_0 : i32, i32
  }
  func.func @transform_3(%arg0: i32) -> (i32, i32) {
    %c0_i32 = arith.constant 0 : i32
    %c0_i32_0 = arith.constant 0 : i32
    %c0_i32_1 = arith.constant 0 : i32
    return %c0_i32, %c0_i32_0 : i32, i32
  }
  func.func @transform_4(%arg0: i32) -> (i32, i32) {
    %c0_i32 = arith.constant 0 : i32
    %c0_i32_0 = arith.constant 0 : i32
    return %arg0, %c0_i32 : i32, i32
  }
}

module attributes {stable_mosaic.version = 11 : i64} {
  func.func @_up_stats_kernel(%arg0: i32, %arg1: memref<168x16xbf16, #tpu.memory_space<vmem>>, %arg2: memref<16x16xbf16, #tpu.memory_space<vmem>>, %arg3: memref<1x16xf32, #tpu.memory_space<vmem>>, %arg4: memref<8x168xf32, #tpu.memory_space<vmem>>, %arg5: memref<1x2x8x16xf32, #tpu.memory_space<vmem>>) attributes {dimension_semantics = [#tpu.dimension_semantics<parallel>], iteration_bounds = array<i64: 1>, scalar_prefetch = 0 : i64, scratch_operands = 0 : i64, tpu.core_type = #tpu.core_type<tc>, window_params = [{transform_indices = @transform_0, window_bounds = array<i64: 168, 16>}, {pipeline_mode = #tpu.pipeline_mode<synchronous>, transform_indices = @transform_1, window_bounds = array<i64: 16, 16>}, {pipeline_mode = #tpu.pipeline_mode<synchronous>, transform_indices = @transform_2, window_bounds = array<i64: 1, 16>}, {transform_indices = @transform_3, window_bounds = array<i64: 8, 168>}, {transform_indices = @transform_4, window_bounds = array<i64: 1, 2, 8, 16>}]} {
    %c0 = arith.constant 0 : index
    %c0_0 = arith.constant 0 : index
    %0 = vector.load %arg1[%c0, %c0_0] : memref<168x16xbf16, #tpu.memory_space<vmem>>, vector<168x16xbf16>
    %c0_1 = arith.constant 0 : index
    %c0_2 = arith.constant 0 : index
    %1 = vector.load %arg2[%c0_1, %c0_2] : memref<16x16xbf16, #tpu.memory_space<vmem>>, vector<16x16xbf16>
    %cst = arith.constant dense<0.000000e+00> : vector<168x16xf32>
    %2 = tpu.matmul %0, %1, %cst {dimension_numbers = #tpu.dot_dimension_numbers<[1], [0], [0], [1], [0, 0, 1, 1], [], []>} : vector<168x16xbf16>, vector<16x16xbf16>, vector<168x16xf32> -> vector<168x16xf32>
    %c0_3 = arith.constant 0 : index
    %c0_4 = arith.constant 0 : index
    %3 = vector.load %arg3[%c0_3, %c0_4] : memref<1x16xf32, #tpu.memory_space<vmem>>, vector<1x16xf32>
    %4 = vector.broadcast %3 : vector<1x16xf32> to vector<168x16xf32>
    %5 = arith.addf %2, %4 : vector<168x16xf32>
    %c0_5 = arith.constant 0 : index
    %c0_6 = arith.constant 0 : index
    %6 = vector.load %arg4[%c0_5, %c0_6] : memref<8x168xf32, #tpu.memory_space<vmem>>, vector<8x168xf32>
    %cst_7 = arith.constant dense<0.000000e+00> : vector<8x16xf32>
    %7 = tpu.matmul %6, %5, %cst_7 {dimension_numbers = #tpu.dot_dimension_numbers<[1], [0], [0], [1], [0, 0, 1, 1], [], []>} : vector<8x168xf32>, vector<168x16xf32>, vector<8x16xf32> -> vector<8x16xf32>
    %c0_8 = arith.constant 0 : index
    %c0_9 = arith.constant 0 : index
    %c0_10 = arith.constant 0 : index
    %c0_11 = arith.constant 0 : index
    %8 = vector.load %arg5[%c0_8, %c0_9, %c0_10, %c0_11] : memref<1x2x8x16xf32, #tpu.memory_space<vmem>>, vector<1x1x8x16xf32>
    %9 = vector.shape_cast %8 : vector<1x1x8x16xf32> to vector<8x16xf32>
    %10 = vector.shape_cast %7 : vector<8x16xf32> to vector<1x1x8x16xf32>
    tpu.vector_store %arg5[%c0_8, %c0_9, %c0_10, %c0_11], %10 {strides = array<i32>} : memref<1x2x8x16xf32, #tpu.memory_space<vmem>>, vector<1x1x8x16xf32>,
    %11 = arith.mulf %5, %5 : vector<168x16xf32>
    %cst_12 = arith.constant dense<0.000000e+00> : vector<8x16xf32>
    %12 = tpu.matmul %6, %11, %cst_12 {dimension_numbers = #tpu.dot_dimension_numbers<[1], [0], [0], [1], [0, 0, 1, 1], [], []>} : vector<8x168xf32>, vector<168x16xf32>, vector<8x16xf32> -> vector<8x16xf32>
    %c0_13 = arith.constant 0 : index
    %c1 = arith.constant 1 : index
    %c0_14 = arith.constant 0 : index
    %c0_15 = arith.constant 0 : index
    %13 = vector.load %arg5[%c0_13, %c1, %c0_14, %c0_15] : memref<1x2x8x16xf32, #tpu.memory_space<vmem>>, vector<1x1x8x16xf32>
    %14 = vector.shape_cast %13 : vector<1x1x8x16xf32> to vector<8x16xf32>
    %15 = vector.shape_cast %12 : vector<8x16xf32> to vector<1x1x8x16xf32>
    tpu.vector_store %arg5[%c0_13, %c1, %c0_14, %c0_15], %15 {strides = array<i32>} : memref<1x2x8x16xf32, #tpu.memory_space<vmem>>, vector<1x1x8x16xf32>,
    return
  }
  func.func @transform_0(%arg0: i32) -> (i32, i32) {
    %c0_i32 = arith.constant 0 : i32
    %c0_i32_0 = arith.constant 0 : i32
    return %arg0, %c0_i32 : i32, i32
  }
  func.func @transform_1(%arg0: i32) -> (i32, i32) {
    %c0_i32 = arith.constant 0 : i32
    %c0_i32_0 = arith.constant 0 : i32
    %c0_i32_1 = arith.constant 0 : i32
    return %c0_i32, %c0_i32_0 : i32, i32
  }
  func.func @transform_2(%arg0: i32) -> (i32, i32) {
    %c0_i32 = arith.constant 0 : i32
    %c0_i32_0 = arith.constant 0 : i32
    %c0_i32_1 = arith.constant 0 : i32
    return %c0_i32, %c0_i32_0 : i32, i32
  }
  func.func @transform_3(%arg0: i32) -> (i32, i32) {
    %c0_i32 = arith.constant 0 : i32
    %c0_i32_0 = arith.constant 0 : i32
    return %c0_i32, %arg0 : i32, i32
  }
  func.func @transform_4(%arg0: i32) -> (i32, i32, i32, i32) {
    %c0_i32 = arith.constant 0 : i32
    %c0_i32_0 = arith.constant 0 : i32
    %c0_i32_1 = arith.constant 0 : i32
    %c0_i32_2 = arith.constant 0 : i32
    return %arg0, %c0_i32, %c0_i32_0, %c0_i32_1 : i32, i32, i32, i32
  }
}

</mosaic_0001>

<llo_original>
// kernel: unet_innermost_forward.3
$region0: #{unet_innermost_forward.3}
  #allocation0 [shape = 'u32[]', space=smem, size = 0x4, offset = 0x4, fixed_abs, tag = 'smem constant byte address 0x4 - core index']
  #allocation1 [shape = 'u32[144,128]{1,0:T(1,128)}', space=vmem, size = 0x12000, scoped, tag = 'internal scratch']
  %s0 = inlined_call_operand.vmem [shape: bf16[128,128], index: 0, kind: input, shape index: {}]
  %s1 = inlined_call_operand.vmem [shape: bf16[128,4], index: 1, kind: input, shape index: {}]
  %s2 = inlined_call_operand.vmem [shape: f32[1,4], index: 2, kind: input, shape index: {}]
  %s3 = inlined_call_operand.vmem [shape: bf16[128,4], index: 3, kind: output, shape index: {}]
  %s4 = sld [smem:[#allocation0]]
  $region22: #{unet_innermost_forward.3} parent=0
    _
  %s6 = ssub.s32 1, %s4
  %s7 = scalar_select 0, %s6, %s4
  // Predicated region
  $region2: #{unet_innermost_forward.3} parent=0 // pred_check
    _
  $region3: #{unet_innermost_forward.3} parent=0 // pred_check_branch
    %9 = sbr.rel (0) target = $region5
  $region4: #{unet_innermost_forward.3} parent=0 // pred_region
    _
  $region5: #{unet_innermost_forward.3} parent=0 // pred_fallthru
    _
  // Predicated region
  $region6: #{unet_innermost_forward.3} parent=0 // pred_check
    _
  $region7: #{unet_innermost_forward.3} parent=0 // pred_check_branch
    %11 = sbr.rel (0) target = $region9
  $region8: #{unet_innermost_forward.3} parent=0 // pred_region
    _
  $region9: #{unet_innermost_forward.3} parent=0 // pred_fallthru
    _
  // Predicated region
  $region10: #{unet_innermost_forward.3} parent=0 // pred_check
    _
  $region11: #{unet_innermost_forward.3} parent=0 // pred_check_branch
    %13 = sbr.rel (0) target = $region13
  $region12: #{unet_innermost_forward.3} parent=0 // pred_region
    _
  $region13: #{unet_innermost_forward.3} parent=0 // pred_fallthru
    _
  %v15 = vld [vmem:[%s0] sm:$0xf]
  %v16 = vld [vmem:[%s0 + $0x4] sm:$0xf]
  %v17 = vld [vmem:[%s0 + $0x8] sm:$0xf]
  %v18 = vld [vmem:[%s0 + $0xc] sm:$0xf]
  %v19 = vld [vmem:[%s0 + $0x10] sm:$0xf]
  %v20 = vld [vmem:[%s0 + $0x14] sm:$0xf]
  %v21 = vld [vmem:[%s0 + $0x18] sm:$0xf]
  %v22 = vld [vmem:[%s0 + $0x1c] sm:$0xf]
  %v23 = vld [vmem:[%s0 + $0x20] sm:$0xf]
  %v24 = vld [vmem:[%s0 + $0x24] sm:$0xf]
  %v25 = vld [vmem:[%s0 + $0x28] sm:$0xf]
  %v26 = vld [vmem:[%s0 + $0x2c] sm:$0xf]
  %v27 = vld [vmem:[%s0 + $0x30] sm:$0xf]
  %v28 = vld [vmem:[%s0 + $0x34] sm:$0xf]
  %v29 = vld [vmem:[%s0 + $0x38] sm:$0xf]
  %v30 = vld [vmem:[%s0 + $0x3c] sm:$0xf]
  %v31 = vld [vmem:[%s1] sm:$0xf]
  %v32 = vld [vmem:[%s1 + $0x4] sm:$0xf]
  %v33 = vld [vmem:[%s1 + $0x8] sm:$0xf]
  %v34 = vld [vmem:[%s1 + $0xc] sm:$0xf]
  %v35 = vld [vmem:[%s1 + $0x10] sm:$0xf]
  %v36 = vld [vmem:[%s1 + $0x14] sm:$0xf]
  %v37 = vld [vmem:[%s1 + $0x18] sm:$0xf]
  %v38 = vld [vmem:[%s1 + $0x1c] sm:$0xf]
  %v39 = vld [vmem:[%s1 + $0x20] sm:$0xf]
  %v40 = vld [vmem:[%s1 + $0x24] sm:$0xf]
  %v41 = vld [vmem:[%s1 + $0x28] sm:$0xf]
  %v42 = vld [vmem:[%s1 + $0x2c] sm:$0xf]
  %v43 = vld [vmem:[%s1 + $0x30] sm:$0xf]
  %v44 = vld [vmem:[%s1 + $0x34] sm:$0xf]
  %v45 = vld [vmem:[%s1 + $0x38] sm:$0xf]
  %v46 = vld [vmem:[%s1 + $0x3c] sm:$0xf]
  %v47 = vld [vmem:[%s2] sm:$0x1]
  %v49 = vlaneseq
  %v50 = vshrl.u32 %v49, 7
  %v51 = vsub.s32 0, %v50
  %v52 = vrot.slane %v47, %v51
  %v70 = vunpack.c.l.b16 %v15
  %v71 = vunpack.c.l.b16 %v16
  %v72 = vunpack.c.l.b16 %v17
  %v73 = vunpack.c.l.b16 %v18
  %v74 = vunpack.c.l.b16 %v19
  %v75 = vunpack.c.l.b16 %v20
  %v76 = vunpack.c.l.b16 %v21
  %v77 = vunpack.c.l.b16 %v22
  %v78 = vunpack.c.l.b16 %v23
  %v79 = vunpack.c.l.b16 %v24
  %v80 = vunpack.c.l.b16 %v25
  %v81 = vunpack.c.l.b16 %v26
  %v82 = vunpack.c.l.b16 %v27
  %v83 = vunpack.c.l.b16 %v28
  %v84 = vunpack.c.l.b16 %v29
  %v85 = vunpack.c.l.b16 %v30
  %v86 = vpack.c.b16 %v71, %v70
  %v87 = vpack.c.b16 %v73, %v72
  %v88 = vpack.c.b16 %v75, %v74
  %v89 = vpack.c.b16 %v77, %v76
  %v90 = vpack.c.b16 %v79, %v78
  %v91 = vpack.c.b16 %v81, %v80
  %v92 = vpack.c.b16 %v83, %v82
  %v93 = vpack.c.b16 %v85, %v84
  %v118 = vunpack.c.l.b16 %v31
  %v119 = vunpack.c.l.b16 %v32
  %v120 = vunpack.c.l.b16 %v33
  %v121 = vunpack.c.l.b16 %v34
  %v122 = vunpack.c.l.b16 %v35
  %v123 = vunpack.c.l.b16 %v36
  %v124 = vunpack.c.l.b16 %v37
  %v125 = vunpack.c.l.b16 %v38
  %v126 = vunpack.c.l.b16 %v39
  %v127 = vunpack.c.l.b16 %v40
  %v128 = vunpack.c.l.b16 %v41
  %v129 = vunpack.c.l.b16 %v42
  %v130 = vunpack.c.l.b16 %v43
  %v131 = vunpack.c.l.b16 %v44
  %v132 = vunpack.c.l.b16 %v45
  %v133 = vunpack.c.l.b16 %v46
  %v134 = vpack.c.b16 %v119, %v118
  %v135 = vpack.c.b16 %v121, %v120
  %v136 = vpack.c.b16 %v123, %v122
  %v137 = vpack.c.b16 %v125, %v124
  %v138 = vpack.c.b16 %v127, %v126
  %v139 = vpack.c.b16 %v129, %v128
  %v140 = vpack.c.b16 %v131, %v130
  %v141 = vpack.c.b16 %v133, %v132
  %150 = vmatprep.subr.bf16.mxu0 0
  %151 = vmatpush1.bf16.msra.mxu0 %v141
  %152 = vmatprep.subr.bf16.mxu0 0
  %153 = vmatpush1.bf16.msra.mxu0 %v140
  %154 = vmatprep.subr.bf16.mxu0 0
  %155 = vmatpush1.bf16.msra.mxu0 %v139
  %156 = vmatprep.subr.bf16.mxu0 0
  %157 = vmatpush1.bf16.msra.mxu0 %v138
  %158 = vmatprep.subr.bf16.mxu0 0
  %159 = vmatpush1.bf16.msra.mxu0 %v137
  %160 = vmatprep.subr.bf16.mxu0 0
  %161 = vmatpush1.bf16.msra.mxu0 %v136
  %162 = vmatprep.subr.bf16.mxu0 0
  %163 = vmatpush1.bf16.msra.mxu0 %v135
  %164 = vmatprep.subr.bf16.mxu0 0
  %165 = vmatpush1.bf16.msra.mxu0 %v134
  %166 = vmatprep.subr.bf16.mxu0 0
  %167 = vmatpush2.bf16.msra.mxu0 0
  %168 = vmatprep.subr.bf16.mxu0 0
  %169 = vmatpush2.bf16.msra.mxu0 0
  %170 = vmatprep.subr.bf16.mxu0 0
  %171 = vmatpush2.bf16.msra.mxu0 0
  %172 = vmatprep.subr.bf16.mxu0 0
  %173 = vmatpush2.bf16.msra.mxu0 0
  %174 = vmatprep.subr.bf16.mxu0 0
  %175 = vmatpush2.bf16.msra.mxu0 0
  %176 = vmatprep.subr.bf16.mxu0 0
  %177 = vmatpush2.bf16.msra.mxu0 0
  %178 = vmatprep.subr.bf16.mxu0 0
  %179 = vmatpush2.bf16.msra.mxu0 0
  %180 = vmatprep.subr.bf16.mxu0 0
  %181 = vmatpush2.bf16.msra.mxu0 0
  %182 = vmatprep.mubr.bf16.mxu0 0
  %183 = vmatmul.mubr.bf16.gmra.mxu0 %v86
  %v184 = vpop.f32.mrf.mxu0
  %v185 = vadd.f32 %v52, %v184
  %v186 = vpop.f32.mrf.mxu0
  %v187 = vpop.f32.mrf.mxu0
  %v188 = vadd.f32 %v52, %v187
  %v189 = vpop.f32.mrf.mxu0
  %190 = vmatprep.mubr.bf16.mxu0 0
  %191 = vmatmul.mubr.bf16.gmra.mxu0 %v87
  %v192 = vpop.f32.mrf.mxu0
  %v193 = vadd.f32 %v52, %v192
  %v194 = vpop.f32.mrf.mxu0
  %v195 = vpop.f32.mrf.mxu0
  %v196 = vadd.f32 %v52, %v195
  %v197 = vpop.f32.mrf.mxu0
  %198 = vmatprep.mubr.bf16.mxu0 0
  %199 = vmatmul.mubr.bf16.gmra.mxu0 %v88
  %v200 = vpop.f32.mrf.mxu0
  %v201 = vadd.f32 %v52, %v200
  %v202 = vpop.f32.mrf.mxu0
  %v203 = vpop.f32.mrf.mxu0
  %v204 = vadd.f32 %v52, %v203
  %v205 = vpop.f32.mrf.mxu0
  %206 = vmatprep.mubr.bf16.mxu0 0
  %207 = vmatmul.mubr.bf16.gmra.mxu0 %v89
  %v208 = vpop.f32.mrf.mxu0
  %v209 = vadd.f32 %v52, %v208
  %v210 = vpop.f32.mrf.mxu0
  %v211 = vpop.f32.mrf.mxu0
  %v212 = vadd.f32 %v52, %v211
  %v213 = vpop.f32.mrf.mxu0
  %214 = vmatprep.mubr.bf16.mxu0 0
  %215 = vmatmul.mubr.bf16.gmra.mxu0 %v90
  %v216 = vpop.f32.mrf.mxu0
  %v217 = vadd.f32 %v52, %v216
  %v218 = vpop.f32.mrf.mxu0
  %v219 = vpop.f32.mrf.mxu0
  %v220 = vadd.f32 %v52, %v219
  %v221 = vpop.f32.mrf.mxu0
  %222 = vmatprep.mubr.bf16.mxu0 0
  %223 = vmatmul.mubr.bf16.gmra.mxu0 %v91
  %v224 = vpop.f32.mrf.mxu0
  %v225 = vadd.f32 %v52, %v224
  %v226 = vpop.f32.mrf.mxu0
  %v227 = vpop.f32.mrf.mxu0
  %v228 = vadd.f32 %v52, %v227
  %v229 = vpop.f32.mrf.mxu0
  %230 = vmatprep.mubr.bf16.mxu0 0
  %231 = vmatmul.mubr.bf16.gmra.mxu0 %v92
  %v232 = vpop.f32.mrf.mxu0
  %v233 = vadd.f32 %v52, %v232
  %v234 = vpop.f32.mrf.mxu0
  %v235 = vpop.f32.mrf.mxu0
  %v236 = vadd.f32 %v52, %v235
  %v237 = vpop.f32.mrf.mxu0
  %238 = vmatprep.mubr.bf16.mxu0 0
  %239 = vmatmul.mubr.bf16.gmra.mxu0 %v93
  %v240 = vpop.f32.mrf.mxu0
  %v241 = vadd.f32 %v52, %v240
  %v242 = vpop.f32.mrf.mxu0
  %v243 = vpop.f32.mrf.mxu0
  %v244 = vadd.f32 %v52, %v243
  %v245 = vpop.f32.mrf.mxu0
  %246 = vdwg.mxu0
  %v247 = vmax.f32 %v185, 0.0
  %v248 = vmax.f32 %v188, 0.0
  %v249 = vmax.f32 %v193, 0.0
  %v250 = vmax.f32 %v196, 0.0
  %v251 = vmax.f32 %v201, 0.0
  %v252 = vmax.f32 %v204, 0.0
  %v253 = vmax.f32 %v209, 0.0
  %v254 = vmax.f32 %v212, 0.0
  %v255 = vmax.f32 %v217, 0.0
  %v256 = vmax.f32 %v220, 0.0
  %v257 = vmax.f32 %v225, 0.0
  %v258 = vmax.f32 %v228, 0.0
  %v259 = vmax.f32 %v233, 0.0
  %v260 = vmax.f32 %v236, 0.0
  %v261 = vmax.f32 %v241, 0.0
  %v262 = vmax.f32 %v244, 0.0
  %v263 = vpack.c.bf16 %v248, %v247
  %v264 = vpack.c.bf16 %v250, %v249
  %v265 = vpack.c.bf16 %v252, %v251
  %v266 = vpack.c.bf16 %v254, %v253
  %v267 = vpack.c.bf16 %v256, %v255
  %v268 = vpack.c.bf16 %v258, %v257
  %v269 = vpack.c.bf16 %v260, %v259
  %v270 = vpack.c.bf16 %v262, %v261
  %v279 = vunpack.c.l.b16 %v263
  %v280 = vunpack.c.h.b16 %v263
  %v281 = vunpack.c.l.b16 %v264
  %v282 = vunpack.c.h.b16 %v264
  %v283 = vunpack.c.l.b16 %v265
  %v284 = vunpack.c.h.b16 %v265
  %v285 = vunpack.c.l.b16 %v266
  %v286 = vunpack.c.h.b16 %v266
  %v287 = vunpack.c.l.b16 %v267
  %v288 = vunpack.c.h.b16 %v267
  %v289 = vunpack.c.l.b16 %v268
  %v290 = vunpack.c.h.b16 %v268
  %v291 = vunpack.c.l.b16 %v269
  %v292 = vunpack.c.h.b16 %v269
  %v293 = vunpack.c.l.b16 %v270
  %v294 = vunpack.c.h.b16 %v270
  %v295 = vpack.c.b16 %v279, %v279
  %v296 = vpack.c.b16 %v280, %v280
  %v297 = vpack.c.b16 %v281, %v281
  %v298 = vpack.c.b16 %v282, %v282
  %v299 = vpack.c.b16 %v283, %v283
  %v300 = vpack.c.b16 %v284, %v284
  %v301 = vpack.c.b16 %v285, %v285
  %v302 = vpack.c.b16 %v286, %v286
  %v303 = vpack.c.b16 %v287, %v287
  %v304 = vpack.c.b16 %v288, %v288
  %v305 = vpack.c.b16 %v289, %v289
  %v306 = vpack.c.b16 %v290, %v290
  %v307 = vpack.c.b16 %v291, %v291
  %v308 = vpack.c.b16 %v292, %v292
  %v309 = vpack.c.b16 %v293, %v293
  %v310 = vpack.c.b16 %v294, %v294
  %vm327 = vcmask 27648
  %328 = vst.msk [vmem:[%s3] sm:$0xf] %vm327, %v295
  %329 = vst.msk [vmem:[%s3 + $0x4] sm:$0xf] %vm327, %v296
  %330 = vst.msk [vmem:[%s3 + $0x8] sm:$0xf] %vm327, %v297
  %331 = vst.msk [vmem:[%s3 + $0xc] sm:$0xf] %vm327, %v298
  %332 = vst.msk [vmem:[%s3 + $0x10] sm:$0xf] %vm327, %v299
  %333 = vst.msk [vmem:[%s3 + $0x14] sm:$0xf] %vm327, %v300
  %334 = vst.msk [vmem:[%s3 + $0x18] sm:$0xf] %vm327, %v301
  %335 = vst.msk [vmem:[%s3 + $0x1c] sm:$0xf] %vm327, %v302
  %336 = vst.msk [vmem:[%s3 + $0x20] sm:$0xf] %vm327, %v303
  %337 = vst.msk [vmem:[%s3 + $0x24] sm:$0xf] %vm327, %v304
  %338 = vst.msk [vmem:[%s3 + $0x28] sm:$0xf] %vm327, %v305
  %339 = vst.msk [vmem:[%s3 + $0x2c] sm:$0xf] %vm327, %v306
  %340 = vst.msk [vmem:[%s3 + $0x30] sm:$0xf] %vm327, %v307
  %341 = vst.msk [vmem:[%s3 + $0x34] sm:$0xf] %vm327, %v308
  %342 = vst.msk [vmem:[%s3 + $0x38] sm:$0xf] %vm327, %v309
  %343 = vst.msk [vmem:[%s3 + $0x3c] sm:$0xf] %vm327, %v310
  // Predicated region
  $region14: #{unet_innermost_forward.3} parent=0 // pred_check
    _
  $region15: #{unet_innermost_forward.3} parent=0 // pred_check_branch
    %345 = sbr.rel (0) target = $region17
  $region16: #{unet_innermost_forward.3} parent=0 // pred_region
    _
  $region17: #{unet_innermost_forward.3} parent=0 // pred_fallthru
    _
  // Predicated region
  $region18: #{unet_innermost_forward.3} parent=0 // pred_check
    _
  $region19: #{unet_innermost_forward.3} parent=0 // pred_check_branch
    %347 = sbr.rel (0) target = $region21
  $region20: #{unet_innermost_forward.3} parent=0 // pred_region
    _
  $region21: #{unet_innermost_forward.3} parent=0 // pred_fallthru
    _

// kernel: tile.18
$region0: #{tile.18}
  %s0 = inlined_call_operand.vmem [shape: f32[4,2,81], index: 0, kind: input, shape index: {}]
  %s1 = inlined_call_operand.vmem [shape: f32[4,162], index: 1, kind: output, shape index: {}]
  $region1: #{tile.18} parent=0
    #allocation0 [shape = 'u8[8192]{0}', space=vmem, size = 0x2000, scoped, tag = 'scoped mem for output reshape']
    #allocation1 [shape = 'u8[16384]{0}', space=vmem, size = 0x4000, scoped, tag = 'scoped mem for input reshape']
    %s3 = sshll.u32 1, 2
    %s4 = ssub.s32 %s3, 1
    %s5 = smul.addr 2, 3
    %s6 = scalar_lea.vmem %s0, %s5
    %v7 = vld [vmem:[%s6] sm:%s4]
    %s8 = scalar_lea.vmem [#allocation1], 24
    %9 = vst [vmem:[%s8] sm:%s4] %v7
    %s10 = smul.addr 2, 2
    %s11 = scalar_lea.vmem %s0, %s10
    %v12 = vld [vmem:[%s11] sm:%s4]
    %s13 = scalar_lea.vmem [#allocation1], 16
    %14 = vst [vmem:[%s13] sm:%s4] %v12
    %s15 = scalar_lea.vmem %s0, 2
    %v16 = vld [vmem:[%s15] sm:%s4]
    %s17 = scalar_lea.vmem [#allocation1], 8
    %18 = vst [vmem:[%s17] sm:%s4] %v16
    %v19 = vld [vmem:[%s0] sm:%s4]
    %20 = vst [vmem:[#allocation1] sm:%s4] %v19
    %v21 = vld [vmem:[#allocation1] ss:$8 sm:$0xf]
    %vm22 = vcmask 662528
    %23 = vst.msk [vmem:[#allocation0] sm:$0xf] %vm22, %v21
    %s24 = scalar_lea.vmem [#allocation1], 1
    %v25 = vld [vmem:[%s24] ss:$8 sm:$0xf]
    %s26 = scalar_lea.vmem [#allocation1], 1
    %v27 = vld [vmem:[%s26] ss:$8 sm:$0xf]
    %vm28 = vcmask 384000
    %v29 = vsel %vm28, %v27, %v25
    %30 = vrot.lane.b32.xlu0 %v29, 81
    %v31 = vpop.permute.xlu0 %30
    %vm32 = vcmask 277504
    %s33 = scalar_lea.vmem [#allocation0], 8
    %34 = vst.msk [vmem:[%s33] sm:$0xf] %vm32, %v31
    %vm35 = vcmask 1048200
    %36 = vst.msk [vmem:[#allocation0] sm:$0xf] %vm35, %v31
    %s38 = sshll.u32 1, 4
    %s39 = ssub.s32 %s38, 1
    %v41 = vld [vmem:[#allocation0] sm:%s39]
    %s42 = sshll.u32 1, 4
    %s43 = ssub.s32 %s42, 1
    %44 = vst [vmem:[%s1] sm:%s43] %v41
    %s45 = scalar_lea.vmem [#allocation0], 8
    %v46 = vld [vmem:[%s45] sm:%s39]
    %s47 = sshll.u32 1, 4
    %s48 = ssub.s32 %s47, 1
    %s49 = scalar_lea.vmem %s1, 4
    %50 = vst [vmem:[%s49] sm:%s48] %v46

// kernel: tile.27
$region0: #{tile.27}
  #allocation0 [shape = 's32[1]{0}', space=sflag, size = 0x4, scoped, tag = 'scoped memory for tile.27']
  %s0 = inlined_call_operand.vmem [shape: f32[4], index: 0, kind: input, shape index: {}]
  %s1 = inlined_call_operand.vmem [shape: f32[4,4], index: 1, kind: output, shape index: {}]
  // Predicated region
  $region2: #{tile.27} parent=0 // pred_check
    _
  $region3: #{tile.27} parent=0 // pred_check_branch
    %3 = sbr.rel (0) target = $region5
  $region4: #{tile.27} parent=0 // pred_region
    _
  $region5: #{tile.27} parent=0 // pred_fallthru
    _
  %v4 = vld [vmem:[%s0] ss:$0 sm:$0xff]
  %5 = vst [vmem:[%s1] sm:$0xf] %v4

// kernel: unet_innermost_forward.5
$region0: #{unet_innermost_forward.5}
  #allocation0 [shape = 'u32[]', space=smem, size = 0x4, offset = 0x4, fixed_abs, tag = 'smem constant byte address 0x4 - core index']
  #allocation1 [shape = 'u32[144,128]{1,0:T(1,128)}', space=vmem, size = 0x12000, scoped, tag = 'internal scratch']
  %s0 = inlined_call_operand.vmem [shape: bf16[168,16], index: 0, kind: input, shape index: {}]
  %s1 = inlined_call_operand.vmem [shape: bf16[16,16], index: 1, kind: input, shape index: {}]
  %s2 = inlined_call_operand.vmem [shape: f32[1,16], index: 2, kind: input, shape index: {}]
  %s3 = inlined_call_operand.vmem [shape: f32[1,16], index: 3, kind: input, shape index: {}]
  %s4 = inlined_call_operand.vmem [shape: f32[168,16], index: 4, kind: output, shape index: {}]
  %s5 = sld [smem:[#allocation0]]
  $region26: #{unet_innermost_forward.5} parent=0
    _
  %s7 = ssub.s32 1, %s5
  %s8 = scalar_select 0, %s7, %s5
  // Predicated region
  $region2: #{unet_innermost_forward.5} parent=0 // pred_check
    _
  $region3: #{unet_innermost_forward.5} parent=0 // pred_check_branch
    %10 = sbr.rel (0) target = $region5
  $region4: #{unet_innermost_forward.5} parent=0 // pred_region
    _
  $region5: #{unet_innermost_forward.5} parent=0 // pred_fallthru
    _
  // Predicated region
  $region6: #{unet_innermost_forward.5} parent=0 // pred_check
    _
  $region7: #{unet_innermost_forward.5} parent=0 // pred_check_branch
    %12 = sbr.rel (0) target = $region9
  $region8: #{unet_innermost_forward.5} parent=0 // pred_region
    _
  $region9: #{unet_innermost_forward.5} parent=0 // pred_fallthru
    _
  // Predicated region
  $region10: #{unet_innermost_forward.5} parent=0 // pred_check
    _
  $region11: #{unet_innermost_forward.5} parent=0 // pred_check_branch
    %14 = sbr.rel (0) target = $region13
  $region12: #{unet_innermost_forward.5} parent=0 // pred_region
    _
  $region13: #{unet_innermost_forward.5} parent=0 // pred_fallthru
    _
  // Predicated region
  $region14: #{unet_innermost_forward.5} parent=0 // pred_check
    _
  $region15: #{unet_innermost_forward.5} parent=0 // pred_check_branch
    %16 = sbr.rel (0) target = $region17
  $region16: #{unet_innermost_forward.5} parent=0 // pred_region
    _
  $region17: #{unet_innermost_forward.5} parent=0 // pred_fallthru
    _
  %v18 = vld [vmem:[%s0] sm:$0xf]
  %v19 = vld [vmem:[%s0 + $0x4] sm:$0xf]
  %v20 = vld [vmem:[%s0 + $0x8] sm:$0xf]
  %v21 = vld [vmem:[%s0 + $0xc] sm:$0xf]
  %v22 = vld [vmem:[%s0 + $0x10] sm:$0xf]
  %v23 = vld [vmem:[%s0 + $0x14] sm:$0xf]
  %v24 = vld [vmem:[%s0 + $0x18] sm:$0xf]
  %v25 = vld [vmem:[%s0 + $0x1c] sm:$0xf]
  %v26 = vld [vmem:[%s0 + $0x20] sm:$0xf]
  %v27 = vld [vmem:[%s0 + $0x24] sm:$0xf]
  %v28 = vld [vmem:[%s0 + $0x28] sm:$0xf]
  %v29 = vld [vmem:[%s0 + $0x2c] sm:$0xf]
  %v30 = vld [vmem:[%s0 + $0x30] sm:$0xf]
  %v31 = vld [vmem:[%s0 + $0x34] sm:$0xf]
  %v32 = vld [vmem:[%s0 + $0x38] sm:$0xf]
  %v33 = vld [vmem:[%s0 + $0x3c] sm:$0xf]
  %v34 = vld [vmem:[%s0 + $0x40] sm:$0xf]
  %v35 = vld [vmem:[%s0 + $0x44] sm:$0xf]
  %v36 = vld [vmem:[%s0 + $0x48] sm:$0xf]
  %v37 = vld [vmem:[%s0 + $0x4c] sm:$0xf]
  %v38 = vld [vmem:[%s0 + $0x50] sm:$0xf]
  %v39 = vld [vmem:[%s1] sm:$0xf]
  %v40 = vld [vmem:[%s1 + $0x4] sm:$0xf]
  %v62 = vunpack.c.l.b16 %v18
  %v63 = vunpack.c.l.b16 %v19
  %v64 = vunpack.c.l.b16 %v20
  %v65 = vunpack.c.l.b16 %v21
  %v66 = vunpack.c.l.b16 %v22
  %v67 = vunpack.c.l.b16 %v23
  %v68 = vunpack.c.l.b16 %v24
  %v69 = vunpack.c.l.b16 %v25
  %v70 = vunpack.c.l.b16 %v26
  %v71 = vunpack.c.l.b16 %v27
  %v72 = vunpack.c.l.b16 %v28
  %v73 = vunpack.c.l.b16 %v29
  %v74 = vunpack.c.l.b16 %v30
  %v75 = vunpack.c.l.b16 %v31
  %v76 = vunpack.c.l.b16 %v32
  %v77 = vunpack.c.l.b16 %v33
  %v78 = vunpack.c.l.b16 %v34
  %v79 = vunpack.c.l.b16 %v35
  %v80 = vunpack.c.l.b16 %v36
  %v81 = vunpack.c.l.b16 %v37
  %v82 = vunpack.c.l.b16 %v38
  %v83 = vpack.c.b16 %v63, %v62
  %v84 = vpack.c.b16 %v65, %v64
  %v85 = vpack.c.b16 %v67, %v66
  %v86 = vpack.c.b16 %v69, %v68
  %v87 = vpack.c.b16 %v71, %v70
  %v88 = vpack.c.b16 %v73, %v72
  %v89 = vpack.c.b16 %v75, %v74
  %v90 = vpack.c.b16 %v77, %v76
  %v91 = vpack.c.b16 %v79, %v78
  %v92 = vpack.c.b16 %v81, %v80
  %v93 = vpack.c.b16 %v82, %v82
  %v96 = vunpack.c.l.b16 %v39
  %v97 = vunpack.c.l.b16 %v40
  %v98 = vpack.c.b16 %v97, %v96
  %vm100 = vcmask 130048
  %v102 = vsel %vm100, %v83, 0
  %v105 = vsel %vm100, %v84, 0
  %v108 = vsel %vm100, %v85, 0
  %v111 = vsel %vm100, %v86, 0
  %v114 = vsel %vm100, %v87, 0
  %v117 = vsel %vm100, %v88, 0
  %v120 = vsel %vm100, %v89, 0
  %v123 = vsel %vm100, %v90, 0
  %v126 = vsel %vm100, %v91, 0
  %v129 = vsel %vm100, %v92, 0
  %v132 = vsel %vm100, %v93, 0
  %134 = vmatprep.subr.bf16.mxu0 0
  %135 = vmatpush1.bf16.msra.mxu0 0
  %136 = vmatprep.subr.bf16.mxu0 0
  %137 = vmatpush1.bf16.msra.mxu0 0
  %138 = vmatprep.subr.bf16.mxu0 0
  %139 = vmatpush1.bf16.msra.mxu0 0
  %140 = vmatprep.subr.bf16.mxu0 0
  %141 = vmatpush1.bf16.msra.mxu0 0
  %142 = vmatprep.subr.bf16.mxu0 0
  %143 = vmatpush1.bf16.msra.mxu0 0
  %144 = vmatprep.subr.bf16.mxu0 0
  %145 = vmatpush1.bf16.msra.mxu0 0
  %146 = vmatprep.subr.bf16.mxu0 0
  %147 = vmatpush1.bf16.msra.mxu0 0
  %148 = vmatprep.subr.bf16.mxu0 0
  %149 = vmatpush1.bf16.msra.mxu0 %v98
  %150 = vmatprep.subr.bf16.mxu0 0
  %151 = vmatpush2.bf16.msra.mxu0 0
  %152 = vmatprep.subr.bf16.mxu0 0
  %153 = vmatpush2.bf16.msra.mxu0 0
  %154 = vmatprep.subr.bf16.mxu0 0
  %155 = vmatpush2.bf16.msra.mxu0 0
  %156 = vmatprep.subr.bf16.mxu0 0
  %157 = vmatpush2.bf16.msra.mxu0 0
  %158 = vmatprep.subr.bf16.mxu0 0
  %159 = vmatpush2.bf16.msra.mxu0 0
  %160 = vmatprep.subr.bf16.mxu0 0
  %161 = vmatpush2.bf16.msra.mxu0 0
  %162 = vmatprep.subr.bf16.mxu0 0
  %163 = vmatpush2.bf16.msra.mxu0 0
  %164 = vmatprep.subr.bf16.mxu0 0
  %165 = vmatpush2.bf16.msra.mxu0 0
  %166 = vmatprep.mubr.bf16.mxu0 0
  %167 = vmatmul.mubr.bf16.gmra.mxu0 %v102
  %v168 = vpop.f32.mrf.mxu0
  %v169 = vadd.f32 0.0, %v168
  %v170 = vpop.f32.mrf.mxu0
  %v171 = vpop.f32.mrf.mxu0
  %v172 = vadd.f32 0.0, %v171
  %v173 = vpop.f32.mrf.mxu0
  %174 = vmatprep.mubr.bf16.mxu0 0
  %175 = vmatmul.mubr.bf16.gmra.mxu0 %v105
  %v176 = vpop.f32.mrf.mxu0
  %v177 = vadd.f32 0.0, %v176
  %v178 = vpop.f32.mrf.mxu0
  %v179 = vpop.f32.mrf.mxu0
  %v180 = vadd.f32 0.0, %v179
  %v181 = vpop.f32.mrf.mxu0
  %182 = vmatprep.mubr.bf16.mxu0 0
  %183 = vmatmul.mubr.bf16.gmra.mxu0 %v108
  %v184 = vpop.f32.mrf.mxu0
  %v185 = vadd.f32 0.0, %v184
  %v186 = vpop.f32.mrf.mxu0
  %v187 = vpop.f32.mrf.mxu0
  %v188 = vadd.f32 0.0, %v187
  %v189 = vpop.f32.mrf.mxu0
  %190 = vmatprep.mubr.bf16.mxu0 0
  %191 = vmatmul.mubr.bf16.gmra.mxu0 %v111
  %v192 = vpop.f32.mrf.mxu0
  %v193 = vadd.f32 0.0, %v192
  %v194 = vpop.f32.mrf.mxu0
  %v195 = vpop.f32.mrf.mxu0
  %v196 = vadd.f32 0.0, %v195
  %v197 = vpop.f32.mrf.mxu0
  %198 = vmatprep.mubr.bf16.mxu0 0
  %199 = vmatmul.mubr.bf16.gmra.mxu0 %v114
  %v200 = vpop.f32.mrf.mxu0
  %v201 = vadd.f32 0.0, %v200
  %v202 = vpop.f32.mrf.mxu0
  %v203 = vpop.f32.mrf.mxu0
  %v204 = vadd.f32 0.0, %v203
  %v205 = vpop.f32.mrf.mxu0
  %206 = vmatprep.mubr.bf16.mxu0 0
  %207 = vmatmul.mubr.bf16.gmra.mxu0 %v117
  %v208 = vpop.f32.mrf.mxu0
  %v209 = vadd.f32 0.0, %v208
  %v210 = vpop.f32.mrf.mxu0
  %v211 = vpop.f32.mrf.mxu0
  %v212 = vadd.f32 0.0, %v211
  %v213 = vpop.f32.mrf.mxu0
  %214 = vmatprep.mubr.bf16.mxu0 0
  %215 = vmatmul.mubr.bf16.gmra.mxu0 %v120
  %v216 = vpop.f32.mrf.mxu0
  %v217 = vadd.f32 0.0, %v216
  %v218 = vpop.f32.mrf.mxu0
  %v219 = vpop.f32.mrf.mxu0
  %v220 = vadd.f32 0.0, %v219
  %v221 = vpop.f32.mrf.mxu0
  %222 = vmatprep.mubr.bf16.mxu0 0
  %223 = vmatmul.mubr.bf16.gmra.mxu0 %v123
  %v224 = vpop.f32.mrf.mxu0
  %v225 = vadd.f32 0.0, %v224
  %v226 = vpop.f32.mrf.mxu0
  %v227 = vpop.f32.mrf.mxu0
  %v228 = vadd.f32 0.0, %v227
  %v229 = vpop.f32.mrf.mxu0
  %230 = vmatprep.mubr.bf16.mxu0 0
  %231 = vmatmul.mubr.bf16.gmra.mxu0 %v126
  %v232 = vpop.f32.mrf.mxu0
  %v233 = vadd.f32 0.0, %v232
  %v234 = vpop.f32.mrf.mxu0
  %v235 = vpop.f32.mrf.mxu0
  %v236 = vadd.f32 0.0, %v235
  %v237 = vpop.f32.mrf.mxu0
  %238 = vmatprep.mubr.bf16.mxu0 0
  %239 = vmatmul.mubr.bf16.gmra.mxu0 %v129
  %v240 = vpop.f32.mrf.mxu0
  %v241 = vadd.f32 0.0, %v240
  %v242 = vpop.f32.mrf.mxu0
  %v243 = vpop.f32.mrf.mxu0
  %v244 = vadd.f32 0.0, %v243
  %v245 = vpop.f32.mrf.mxu0
  %246 = vmatprep.mubr.bf16.mxu0 0
  %247 = vmatmul.mubr.bf16.gmra.mxu0 %v132
  %v248 = vpop.f32.mrf.mxu0
  %v249 = vadd.f32 0.0, %v248
  %v250 = vpop.f32.mrf.mxu0
  %v251 = vpop.f32.mrf.mxu0
  %v252 = vpop.f32.mrf.mxu0
  %253 = vdwg.mxu0
  %v254 = vld [vmem:[%s2] sm:$0x1]
  %v256 = vlaneseq
  %v257 = vshrl.u32 %v256, 7
  %v258 = vsub.s32 0, %v257
  %v259 = vrot.slane %v254, %v258
  %v261 = vmul.f32 %v169, %v259
  %v262 = vmul.f32 %v172, %v259
  %v263 = vmul.f32 %v177, %v259
  %v264 = vmul.f32 %v180, %v259
  %v265 = vmul.f32 %v185, %v259
  %v266 = vmul.f32 %v188, %v259
  %v267 = vmul.f32 %v193, %v259
  %v268 = vmul.f32 %v196, %v259
  %v269 = vmul.f32 %v201, %v259
  %v270 = vmul.f32 %v204, %v259
  %v271 = vmul.f32 %v209, %v259
  %v272 = vmul.f32 %v212, %v259
  %v273 = vmul.f32 %v217, %v259
  %v274 = vmul.f32 %v220, %v259
  %v275 = vmul.f32 %v225, %v259
  %v276 = vmul.f32 %v228, %v259
  %v277 = vmul.f32 %v233, %v259
  %v278 = vmul.f32 %v236, %v259
  %v279 = vmul.f32 %v241, %v259
  %v280 = vmul.f32 %v244, %v259
  %v281 = vmul.f32 %v249, %v259
  %v282 = vld [vmem:[%s3] sm:$0x1]
  %v284 = vlaneseq
  %v285 = vshrl.u32 %v284, 7
  %v286 = vsub.s32 0, %v285
  %v287 = vrot.slane %v282, %v286
  %v289 = vadd.f32 %v261, %v287
  %v290 = vadd.f32 %v262, %v287
  %v291 = vadd.f32 %v263, %v287
  %v292 = vadd.f32 %v264, %v287
  %v293 = vadd.f32 %v265, %v287
  %v294 = vadd.f32 %v266, %v287
  %v295 = vadd.f32 %v267, %v287
  %v296 = vadd.f32 %v268, %v287
  %v297 = vadd.f32 %v269, %v287
  %v298 = vadd.f32 %v270, %v287
  %v299 = vadd.f32 %v271, %v287
  %v300 = vadd.f32 %v272, %v287
  %v301 = vadd.f32 %v273, %v287
  %v302 = vadd.f32 %v274, %v287
  %v303 = vadd.f32 %v275, %v287
  %v304 = vadd.f32 %v276, %v287
  %v305 = vadd.f32 %v277, %v287
  %v306 = vadd.f32 %v278, %v287
  %v307 = vadd.f32 %v279, %v287
  %v308 = vadd.f32 %v280, %v287
  %v309 = vadd.f32 %v281, %v287
  %310 = vst.msk [vmem:[%s4] sm:$0xff] %vm100, %v289
  %311 = vst.msk [vmem:[%s4 + $0x8] sm:$0xff] %vm100, %v290
  %312 = vst.msk [vmem:[%s4 + $0x10] sm:$0xff] %vm100, %v291
  %313 = vst.msk [vmem:[%s4 + $0x18] sm:$0xff] %vm100, %v292
  %314 = vst.msk [vmem:[%s4 + $0x20] sm:$0xff] %vm100, %v293
  %315 = vst.msk [vmem:[%s4 + $0x28] sm:$0xff] %vm100, %v294
  %316 = vst.msk [vmem:[%s4 + $0x30] sm:$0xff] %vm100, %v295
  %317 = vst.msk [vmem:[%s4 + $0x38] sm:$0xff] %vm100, %v296
  %318 = vst.msk [vmem:[%s4 + $0x40] sm:$0xff] %vm100, %v297
  %319 = vst.msk [vmem:[%s4 + $0x48] sm:$0xff] %vm100, %v298
  %320 = vst.msk [vmem:[%s4 + $0x50] sm:$0xff] %vm100, %v299
  %321 = vst.msk [vmem:[%s4 + $0x58] sm:$0xff] %vm100, %v300
  %322 = vst.msk [vmem:[%s4 + $0x60] sm:$0xff] %vm100, %v301
  %323 = vst.msk [vmem:[%s4 + $0x68] sm:$0xff] %vm100, %v302
  %324 = vst.msk [vmem:[%s4 + $0x70] sm:$0xff] %vm100, %v303
  %325 = vst.msk [vmem:[%s4 + $0x78] sm:$0xff] %vm100, %v304
  %326 = vst.msk [vmem:[%s4 + $0x80] sm:$0xff] %vm100, %v305
  %327 = vst.msk [vmem:[%s4 + $0x88] sm:$0xff] %vm100, %v306
  %328 = vst.msk [vmem:[%s4 + $0x90] sm:$0xff] %vm100, %v307
  %329 = vst.msk [vmem:[%s4 + $0x98] sm:$0xff] %vm100, %v308
  %330 = vst.msk [vmem:[%s4 + $0xa0] sm:$0xff] %vm100, %v309
  // Predicated region
  $region18: #{unet_innermost_forward.5} parent=0 // pred_check
    _
  $region19: #{unet_innermost_forward.5} parent=0 // pred_check_branch
    %332 = sbr.rel (0) target = $region21
  $region20: #{unet_innermost_forward.5} parent=0 // pred_region
    _
  $region21: #{unet_innermost_forward.5} parent=0 // pred_fallthru
    _
  // Predicated region
  $region22: #{unet_innermost_forward.5} parent=0 // pred_check
    _
  $region23: #{unet_innermost_forward.5} parent=0 // pred_check_branch
    %334 = sbr.rel (0) target = $region25
  $region24: #{unet_innermost_forward.5} parent=0 // pred_region
    _
  $region25: #{unet_innermost_forward.5} parent=0 // pred_fallthru
    _

// kernel: unet_innermost_forward.4
$region0: #{unet_innermost_forward.4}
  #allocation0 [shape = 'u32[]', space=smem, size = 0x4, offset = 0x4, fixed_abs, tag = 'smem constant byte address 0x4 - core index']
  #allocation1 [shape = 'u32[144,128]{1,0:T(1,128)}', space=vmem, size = 0x12000, scoped, tag = 'internal scratch']
  %s0 = inlined_call_operand.vmem [shape: bf16[168,16], index: 0, kind: input, shape index: {}]
  %s1 = inlined_call_operand.vmem [shape: bf16[16,16], index: 1, kind: input, shape index: {}]
  %s2 = inlined_call_operand.vmem [shape: f32[1,16], index: 2, kind: input, shape index: {}]
  %s3 = inlined_call_operand.vmem [shape: f32[8,168], index: 3, kind: input, shape index: {}]
  %s4 = inlined_call_operand.vmem [shape: f32[1,2,8,16], index: 4, kind: output, shape index: {}]
  %s5 = sld [smem:[#allocation0]]
  $region26: #{unet_innermost_forward.4} parent=0
    _
  %s7 = ssub.s32 1, %s5
  %s8 = scalar_select 0, %s7, %s5
  // Predicated region
  $region2: #{unet_innermost_forward.4} parent=0 // pred_check
    _
  $region3: #{unet_innermost_forward.4} parent=0 // pred_check_branch
    %10 = sbr.rel (0) target = $region5
  $region4: #{unet_innermost_forward.4} parent=0 // pred_region
    _
  $region5: #{unet_innermost_forward.4} parent=0 // pred_fallthru
    _
  // Predicated region
  $region6: #{unet_innermost_forward.4} parent=0 // pred_check
    _
  $region7: #{unet_innermost_forward.4} parent=0 // pred_check_branch
    %12 = sbr.rel (0) target = $region9
  $region8: #{unet_innermost_forward.4} parent=0 // pred_region
    _
  $region9: #{unet_innermost_forward.4} parent=0 // pred_fallthru
    _
  // Predicated region
  $region10: #{unet_innermost_forward.4} parent=0 // pred_check
    _
  $region11: #{unet_innermost_forward.4} parent=0 // pred_check_branch
    %14 = sbr.rel (0) target = $region13
  $region12: #{unet_innermost_forward.4} parent=0 // pred_region
    _
  $region13: #{unet_innermost_forward.4} parent=0 // pred_fallthru
    _
  // Predicated region
  $region14: #{unet_innermost_forward.4} parent=0 // pred_check
    _
  $region15: #{unet_innermost_forward.4} parent=0 // pred_check_branch
    %16 = sbr.rel (0) target = $region17
  $region16: #{unet_innermost_forward.4} parent=0 // pred_region
    _
  $region17: #{unet_innermost_forward.4} parent=0 // pred_fallthru
    _
  %v18 = vld [vmem:[%s0] sm:$0xf]
  %v19 = vld [vmem:[%s0 + $0x4] sm:$0xf]
  %v20 = vld [vmem:[%s0 + $0x8] sm:$0xf]
  %v21 = vld [vmem:[%s0 + $0xc] sm:$0xf]
  %v22 = vld [vmem:[%s0 + $0x10] sm:$0xf]
  %v23 = vld [vmem:[%s0 + $0x14] sm:$0xf]
  %v24 = vld [vmem:[%s0 + $0x18] sm:$0xf]
  %v25 = vld [vmem:[%s0 + $0x1c] sm:$0xf]
  %v26 = vld [vmem:[%s0 + $0x20] sm:$0xf]
  %v27 = vld [vmem:[%s0 + $0x24] sm:$0xf]
  %v28 = vld [vmem:[%s0 + $0x28] sm:$0xf]
  %v29 = vld [vmem:[%s0 + $0x2c] sm:$0xf]
  %v30 = vld [vmem:[%s0 + $0x30] sm:$0xf]
  %v31 = vld [vmem:[%s0 + $0x34] sm:$0xf]
  %v32 = vld [vmem:[%s0 + $0x38] sm:$0xf]
  %v33 = vld [vmem:[%s0 + $0x3c] sm:$0xf]
  %v34 = vld [vmem:[%s0 + $0x40] sm:$0xf]
  %v35 = vld [vmem:[%s0 + $0x44] sm:$0xf]
  %v36 = vld [vmem:[%s0 + $0x48] sm:$0xf]
  %v37 = vld [vmem:[%s0 + $0x4c] sm:$0xf]
  %v38 = vld [vmem:[%s0 + $0x50] sm:$0xf]
  %v39 = vld [vmem:[%s1] sm:$0xf]
  %v40 = vld [vmem:[%s1 + $0x4] sm:$0xf]
  %v41 = vld [vmem:[%s2] sm:$0x1]
  %v43 = vlaneseq
  %v44 = vshrl.u32 %v43, 7
  %v45 = vsub.s32 0, %v44
  %v46 = vrot.slane %v41, %v45
  %v69 = vunpack.c.l.b16 %v18
  %v70 = vunpack.c.l.b16 %v19
  %v71 = vunpack.c.l.b16 %v20
  %v72 = vunpack.c.l.b16 %v21
  %v73 = vunpack.c.l.b16 %v22
  %v74 = vunpack.c.l.b16 %v23
  %v75 = vunpack.c.l.b16 %v24
  %v76 = vunpack.c.l.b16 %v25
  %v77 = vunpack.c.l.b16 %v26
  %v78 = vunpack.c.l.b16 %v27
  %v79 = vunpack.c.l.b16 %v28
  %v80 = vunpack.c.l.b16 %v29
  %v81 = vunpack.c.l.b16 %v30
  %v82 = vunpack.c.l.b16 %v31
  %v83 = vunpack.c.l.b16 %v32
  %v84 = vunpack.c.l.b16 %v33
  %v85 = vunpack.c.l.b16 %v34
  %v86 = vunpack.c.l.b16 %v35
  %v87 = vunpack.c.l.b16 %v36
  %v88 = vunpack.c.l.b16 %v37
  %v89 = vunpack.c.l.b16 %v38
  %v90 = vpack.c.b16 %v70, %v69
  %v91 = vpack.c.b16 %v72, %v71
  %v92 = vpack.c.b16 %v74, %v73
  %v93 = vpack.c.b16 %v76, %v75
  %v94 = vpack.c.b16 %v78, %v77
  %v95 = vpack.c.b16 %v80, %v79
  %v96 = vpack.c.b16 %v82, %v81
  %v97 = vpack.c.b16 %v84, %v83
  %v98 = vpack.c.b16 %v86, %v85
  %v99 = vpack.c.b16 %v88, %v87
  %v100 = vpack.c.b16 %v89, %v89
  %v103 = vunpack.c.l.b16 %v39
  %v104 = vunpack.c.l.b16 %v40
  %v105 = vpack.c.b16 %v104, %v103
  %vm107 = vcmask 130048
  %v109 = vsel %vm107, %v90, 0
  %v112 = vsel %vm107, %v91, 0
  %v115 = vsel %vm107, %v92, 0
  %v118 = vsel %vm107, %v93, 0
  %v121 = vsel %vm107, %v94, 0
  %v124 = vsel %vm107, %v95, 0
  %v127 = vsel %vm107, %v96, 0
  %v130 = vsel %vm107, %v97, 0
  %v133 = vsel %vm107, %v98, 0
  %v136 = vsel %vm107, %v99, 0
  %v139 = vsel %vm107, %v100, 0
  %141 = vmatprep.subr.bf16.mxu0 0
  %142 = vmatpush1.bf16.msra.mxu0 0
  %143 = vmatprep.subr.bf16.mxu0 0
  %144 = vmatpush1.bf16.msra.mxu0 0
  %145 = vmatprep.subr.bf16.mxu0 0
  %146 = vmatpush1.bf16.msra.mxu0 0
  %147 = vmatprep.subr.bf16.mxu0 0
  %148 = vmatpush1.bf16.msra.mxu0 0
  %149 = vmatprep.subr.bf16.mxu0 0
  %150 = vmatpush1.bf16.msra.mxu0 0
  %151 = vmatprep.subr.bf16.mxu0 0
  %152 = vmatpush1.bf16.msra.mxu0 0
  %153 = vmatprep.subr.bf16.mxu0 0
  %154 = vmatpush1.bf16.msra.mxu0 0
  %155 = vmatprep.subr.bf16.mxu0 0
  %156 = vmatpush1.bf16.msra.mxu0 %v105
  %157 = vmatprep.subr.bf16.mxu0 0
  %158 = vmatpush2.bf16.msra.mxu0 0
  %159 = vmatprep.subr.bf16.mxu0 0
  %160 = vmatpush2.bf16.msra.mxu0 0
  %161 = vmatprep.subr.bf16.mxu0 0
  %162 = vmatpush2.bf16.msra.mxu0 0
  %163 = vmatprep.subr.bf16.mxu0 0
  %164 = vmatpush2.bf16.msra.mxu0 0
  %165 = vmatprep.subr.bf16.mxu0 0
  %166 = vmatpush2.bf16.msra.mxu0 0
  %167 = vmatprep.subr.bf16.mxu0 0
  %168 = vmatpush2.bf16.msra.mxu0 0
  %169 = vmatprep.subr.bf16.mxu0 0
  %170 = vmatpush2.bf16.msra.mxu0 0
  %171 = vmatprep.subr.bf16.mxu0 0
  %172 = vmatpush2.bf16.msra.mxu0 0
  %173 = vmatprep.mubr.bf16.mxu0 0
  %174 = vmatmul.mubr.bf16.gmra.mxu0 %v109
  %v175 = vpop.f32.mrf.mxu0
  %v176 = vadd.f32 %v46, %v175
  %v177 = vpop.f32.mrf.mxu0
  %v178 = vpop.f32.mrf.mxu0
  %v179 = vadd.f32 %v46, %v178
  %v180 = vpop.f32.mrf.mxu0
  %181 = vmatprep.mubr.bf16.mxu0 0
  %182 = vmatmul.mubr.bf16.gmra.mxu0 %v112
  %v183 = vpop.f32.mrf.mxu0
  %v184 = vadd.f32 %v46, %v183
  %v185 = vpop.f32.mrf.mxu0
  %v186 = vpop.f32.mrf.mxu0
  %v187 = vadd.f32 %v46, %v186
  %v188 = vpop.f32.mrf.mxu0
  %189 = vmatprep.mubr.bf16.mxu0 0
  %190 = vmatmul.mubr.bf16.gmra.mxu0 %v115
  %v191 = vpop.f32.mrf.mxu0
  %v192 = vadd.f32 %v46, %v191
  %v193 = vpop.f32.mrf.mxu0
  %v194 = vpop.f32.mrf.mxu0
  %v195 = vadd.f32 %v46, %v194
  %v196 = vpop.f32.mrf.mxu0
  %197 = vmatprep.mubr.bf16.mxu0 0
  %198 = vmatmul.mubr.bf16.gmra.mxu0 %v118
  %v199 = vpop.f32.mrf.mxu0
  %v200 = vadd.f32 %v46, %v199
  %v201 = vpop.f32.mrf.mxu0
  %v202 = vpop.f32.mrf.mxu0
  %v203 = vadd.f32 %v46, %v202
  %v204 = vpop.f32.mrf.mxu0
  %205 = vmatprep.mubr.bf16.mxu0 0
  %206 = vmatmul.mubr.bf16.gmra.mxu0 %v121
  %v207 = vpop.f32.mrf.mxu0
  %v208 = vadd.f32 %v46, %v207
  %v209 = vpop.f32.mrf.mxu0
  %v210 = vpop.f32.mrf.mxu0
  %v211 = vadd.f32 %v46, %v210
  %v212 = vpop.f32.mrf.mxu0
  %213 = vmatprep.mubr.bf16.mxu0 0
  %214 = vmatmul.mubr.bf16.gmra.mxu0 %v124
  %v215 = vpop.f32.mrf.mxu0
  %v216 = vadd.f32 %v46, %v215
  %v217 = vpop.f32.mrf.mxu0
  %v218 = vpop.f32.mrf.mxu0
  %v219 = vadd.f32 %v46, %v218
  %v220 = vpop.f32.mrf.mxu0
  %221 = vmatprep.mubr.bf16.mxu0 0
  %222 = vmatmul.mubr.bf16.gmra.mxu0 %v127
  %v223 = vpop.f32.mrf.mxu0
  %v224 = vadd.f32 %v46, %v223
  %v225 = vpop.f32.mrf.mxu0
  %v226 = vpop.f32.mrf.mxu0
  %v227 = vadd.f32 %v46, %v226
  %v228 = vpop.f32.mrf.mxu0
  %229 = vmatprep.mubr.bf16.mxu0 0
  %230 = vmatmul.mubr.bf16.gmra.mxu0 %v130
  %v231 = vpop.f32.mrf.mxu0
  %v232 = vadd.f32 %v46, %v231
  %v233 = vpop.f32.mrf.mxu0
  %v234 = vpop.f32.mrf.mxu0
  %v235 = vadd.f32 %v46, %v234
  %v236 = vpop.f32.mrf.mxu0
  %237 = vmatprep.mubr.bf16.mxu0 0
  %238 = vmatmul.mubr.bf16.gmra.mxu0 %v133
  %v239 = vpop.f32.mrf.mxu0
  %v240 = vadd.f32 %v46, %v239
  %v241 = vpop.f32.mrf.mxu0
  %v242 = vpop.f32.mrf.mxu0
  %v243 = vadd.f32 %v46, %v242
  %v244 = vpop.f32.mrf.mxu0
  %245 = vmatprep.mubr.bf16.mxu0 0
  %246 = vmatmul.mubr.bf16.gmra.mxu0 %v136
  %v247 = vpop.f32.mrf.mxu0
  %v248 = vadd.f32 %v46, %v247
  %v249 = vpop.f32.mrf.mxu0
  %v250 = vpop.f32.mrf.mxu0
  %v251 = vadd.f32 %v46, %v250
  %v252 = vpop.f32.mrf.mxu0
  %253 = vmatprep.mubr.bf16.mxu0 0
  %254 = vmatmul.mubr.bf16.gmra.mxu0 %v139
  %v255 = vpop.f32.mrf.mxu0
  %v256 = vadd.f32 %v46, %v255
  %v257 = vpop.f32.mrf.mxu0
  %v258 = vpop.f32.mrf.mxu0
  %v259 = vpop.f32.mrf.mxu0
  %260 = vdwg.mxu0
  %v261 = vld [vmem:[%s3] sm:$0xff]
  %v262 = vld [vmem:[%s3 + $0x8] sm:$0xff]
  %vm263 = vcmask 326656
  %v265 = vsel %vm263, %v262, 0
  %267 = vmatprep.subr.mxu0 0.0
  %268 = vmatpush1.msra.mxu0 %v235
  %269 = vmatprep.subr.mxu0 0.0
  %270 = vmatpush1.msra.mxu0 %v232
  %271 = vmatprep.subr.mxu0 0.0
  %272 = vmatpush1.msra.mxu0 %v227
  %273 = vmatprep.subr.mxu0 0.0
  %274 = vmatpush1.msra.mxu0 %v224
  %275 = vmatprep.subr.mxu0 0.0
  %276 = vmatpush1.msra.mxu0 %v219
  %277 = vmatprep.subr.mxu0 0.0
  %278 = vmatpush1.msra.mxu0 %v216
  %279 = vmatprep.subr.mxu0 0.0
  %280 = vmatpush1.msra.mxu0 %v211
  %281 = vmatprep.subr.mxu0 0.0
  %282 = vmatpush1.msra.mxu0 %v208
  %283 = vmatprep.subr.mxu0 0.0
  %284 = vmatpush1.msra.mxu0 %v203
  %285 = vmatprep.subr.mxu0 0.0
  %286 = vmatpush1.msra.mxu0 %v200
  %287 = vmatprep.subr.mxu0 0.0
  %288 = vmatpush1.msra.mxu0 %v195
  %289 = vmatprep.subr.mxu0 0.0
  %290 = vmatpush1.msra.mxu0 %v192
  %291 = vmatprep.subr.mxu0 0.0
  %292 = vmatpush1.msra.mxu0 %v187
  %293 = vmatprep.subr.mxu0 0.0
  %294 = vmatpush1.msra.mxu0 %v184
  %295 = vmatprep.subr.mxu0 0.0
  %296 = vmatpush1.msra.mxu0 %v179
  %297 = vmatprep.subr.mxu0 0.0
  %298 = vmatpush1.msra.mxu0 %v176
  %299 = vmatprep.subr.mxu0 0.0
  %300 = vmatpush2.msra.mxu0 0.0
  %301 = vmatprep.subr.mxu0 0.0
  %302 = vmatpush2.msra.mxu0 0.0
  %303 = vmatprep.subr.mxu0 0.0
  %304 = vmatpush2.msra.mxu0 0.0
  %305 = vmatprep.subr.mxu0 0.0
  %306 = vmatpush2.msra.mxu0 0.0
  %307 = vmatprep.subr.mxu0 0.0
  %308 = vmatpush2.msra.mxu0 0.0
  %309 = vmatprep.subr.mxu0 0.0
  %310 = vmatpush2.msra.mxu0 0.0
  %311 = vmatprep.subr.mxu0 0.0
  %312 = vmatpush2.msra.mxu0 0.0
  %313 = vmatprep.subr.mxu0 0.0
  %314 = vmatpush2.msra.mxu0 0.0
  %315 = vmatprep.subr.mxu0 0.0
  %316 = vmatpush2.msra.mxu0 0.0
  %317 = vmatprep.subr.mxu0 0.0
  %318 = vmatpush2.msra.mxu0 0.0
  %319 = vmatprep.subr.mxu0 0.0
  %320 = vmatpush2.msra.mxu0 0.0
  %321 = vmatprep.subr.mxu0 0.0
  %322 = vmatpush2.msra.mxu0 %v256
  %323 = vmatprep.subr.mxu0 0.0
  %324 = vmatpush2.msra.mxu0 %v251
  %325 = vmatprep.subr.mxu0 0.0
  %326 = vmatpush2.msra.mxu0 %v248
  %327 = vmatprep.subr.mxu0 0.0
  %328 = vmatpush2.msra.mxu0 %v243
  %329 = vmatprep.subr.mxu0 0.0
  %330 = vmatpush2.msra.mxu0 %v240
  %331 = vmatprep.mubr.f32.mxu0 %v265
  %332 = vmatmul.mubr.f32.gmra.mxu0 %v261
  %v333 = vpop.f32.mrf.mxu0
  %v334 = vadd.f32 0.0, %v333
  %v335 = vpop.f32.mrf.mxu0
  %336 = vdwg.mxu0
  %337 = vst.msk [vmem:[%s4] sm:$0xff] %vm107, %v334
  %v338 = vmul.f32 %v176, %v176
  %v339 = vmul.f32 %v179, %v179
  %v340 = vmul.f32 %v184, %v184
  %v341 = vmul.f32 %v187, %v187
  %v342 = vmul.f32 %v192, %v192
  %v343 = vmul.f32 %v195, %v195
  %v344 = vmul.f32 %v200, %v200
  %v345 = vmul.f32 %v203, %v203
  %v346 = vmul.f32 %v208, %v208
  %v347 = vmul.f32 %v211, %v211
  %v348 = vmul.f32 %v216, %v216
  %v349 = vmul.f32 %v219, %v219
  %v350 = vmul.f32 %v224, %v224
  %v351 = vmul.f32 %v227, %v227
  %v352 = vmul.f32 %v232, %v232
  %v353 = vmul.f32 %v235, %v235
  %v354 = vmul.f32 %v240, %v240
  %v355 = vmul.f32 %v243, %v243
  %v356 = vmul.f32 %v248, %v248
  %v357 = vmul.f32 %v251, %v251
  %v358 = vmul.f32 %v256, %v256
  %359 = vmatprep.subr.mxu0 0.0
  %360 = vmatpush1.msra.mxu0 %v353
  %361 = vmatprep.subr.mxu0 0.0
  %362 = vmatpush1.msra.mxu0 %v352
  %363 = vmatprep.subr.mxu0 0.0
  %364 = vmatpush1.msra.mxu0 %v351
  %365 = vmatprep.subr.mxu0 0.0
  %366 = vmatpush1.msra.mxu0 %v350
  %367 = vmatprep.subr.mxu0 0.0
  %368 = vmatpush1.msra.mxu0 %v349
  %369 = vmatprep.subr.mxu0 0.0
  %370 = vmatpush1.msra.mxu0 %v348
  %371 = vmatprep.subr.mxu0 0.0
  %372 = vmatpush1.msra.mxu0 %v347
  %373 = vmatprep.subr.mxu0 0.0
  %374 = vmatpush1.msra.mxu0 %v346
  %375 = vmatprep.subr.mxu0 0.0
  %376 = vmatpush1.msra.mxu0 %v345
  %377 = vmatprep.subr.mxu0 0.0
  %378 = vmatpush1.msra.mxu0 %v344
  %379 = vmatprep.subr.mxu0 0.0
  %380 = vmatpush1.msra.mxu0 %v343
  %381 = vmatprep.subr.mxu0 0.0
  %382 = vmatpush1.msra.mxu0 %v342
  %383 = vmatprep.subr.mxu0 0.0
  %384 = vmatpush1.msra.mxu0 %v341
  %385 = vmatprep.subr.mxu0 0.0
  %386 = vmatpush1.msra.mxu0 %v340
  %387 = vmatprep.subr.mxu0 0.0
  %388 = vmatpush1.msra.mxu0 %v339
  %389 = vmatprep.subr.mxu0 0.0
  %390 = vmatpush1.msra.mxu0 %v338
  %391 = vmatprep.subr.mxu0 0.0
  %392 = vmatpush2.msra.mxu0 0.0
  %393 = vmatprep.subr.mxu0 0.0
  %394 = vmatpush2.msra.mxu0 0.0
  %395 = vmatprep.subr.mxu0 0.0
  %396 = vmatpush2.msra.mxu0 0.0
  %397 = vmatprep.subr.mxu0 0.0
  %398 = vmatpush2.msra.mxu0 0.0
  %399 = vmatprep.subr.mxu0 0.0
  %400 = vmatpush2.msra.mxu0 0.0
  %401 = vmatprep.subr.mxu0 0.0
  %402 = vmatpush2.msra.mxu0 0.0
  %403 = vmatprep.subr.mxu0 0.0
  %404 = vmatpush2.msra.mxu0 0.0
  %405 = vmatprep.subr.mxu0 0.0
  %406 = vmatpush2.msra.mxu0 0.0
  %407 = vmatprep.subr.mxu0 0.0
  %408 = vmatpush2.msra.mxu0 0.0
  %409 = vmatprep.subr.mxu0 0.0
  %410 = vmatpush2.msra.mxu0 0.0
  %411 = vmatprep.subr.mxu0 0.0
  %412 = vmatpush2.msra.mxu0 0.0
  %413 = vmatprep.subr.mxu0 0.0
  %414 = vmatpush2.msra.mxu0 %v358
  %415 = vmatprep.subr.mxu0 0.0
  %416 = vmatpush2.msra.mxu0 %v357
  %417 = vmatprep.subr.mxu0 0.0
  %418 = vmatpush2.msra.mxu0 %v356
  %419 = vmatprep.subr.mxu0 0.0
  %420 = vmatpush2.msra.mxu0 %v355
  %421 = vmatprep.subr.mxu0 0.0
  %422 = vmatpush2.msra.mxu0 %v354
  %423 = vmatprep.mubr.f32.mxu0 %v265
  %424 = vmatmul.mubr.f32.gmra.mxu0 %v261
  %v425 = vpop.f32.mrf.mxu0
  %v426 = vadd.f32 0.0, %v425
  %v427 = vpop.f32.mrf.mxu0
  %428 = vdwg.mxu0
  %s429 = scalar_lea.vmem %s4, 8
  %430 = vst.msk [vmem:[%s429] sm:$0xff] %vm107, %v426
  // Predicated region
  $region18: #{unet_innermost_forward.4} parent=0 // pred_check
    _
  $region19: #{unet_innermost_forward.4} parent=0 // pred_check_branch
    %432 = sbr.rel (0) target = $region21
  $region20: #{unet_innermost_forward.4} parent=0 // pred_region
    _
  $region21: #{unet_innermost_forward.4} parent=0 // pred_fallthru
    _
  // Predicated region
  $region22: #{unet_innermost_forward.4} parent=0 // pred_check
    _
  $region23: #{unet_innermost_forward.4} parent=0 // pred_check_branch
    %434 = sbr.rel (0) target = $region25
  $region24: #{unet_innermost_forward.4} parent=0 // pred_region
    _
  $region25: #{unet_innermost_forward.4} parent=0 // pred_fallthru
    _

</llo_original>
